<compile_context>
chip_gen: v7x
topology: tpu7x:2x2x1
jax: 0.10.0
libtpu: 0.0.40
codegen_flags: <defaults>
</compile_context>

<pallas_src>
import jax
import jax.numpy as jnp
from jax.experimental import pallas as pl
from jax.experimental.pallas import tpu as pltpu

BRANCHES = [
    # (name, in_features, hidden/out_features)
    ("arm_pos",    16, 32),
    ("arm_vel",     8, 16),
    ("touch",       5, 10),
    ("hand_pos",    4,  8),
    ("object_pos",  4,  8),
    ("object_vel",  3,  6),
    ("target_pos",  4,  8),
]
N_BR = len(BRANCHES)
IN_DIM = sum(d for _, d, _ in BRANCHES)    # 44
OUT_DIM = sum(h for _, _, h in BRANCHES)   # 88
P = 128                                    # lane-padded feature width
LN_EPS = 1e-5

# Row layout of the packed "consts" array (masks no longer needed).
_B1, _B2, _GAMMA, _BETA = 0, 1, 2, 3
N_CONST_ROWS = 4

# Per-grid-step row cap.  Double-buffered per-tile footprint at 2048 rows is
# ~(2048*(44+128)*4 B)*2 ≈ 2.8 MB — comfortably inside the 16 MiB (v5e) /
# 32 MiB (v6e/v7x) default scoped-VMEM limits and far below v7x's 64 MiB
# physical VMEM per TensorCore.
MAX_TILE_ROWS = 2048


def _round_up(n, m):
    return ((n + m - 1) // m) * m


def _cdiv(a, b):
    return -(-a // b)


def fused_kernel(x_ref, w1_ref, w2_ref, a_ref, c_ref, o_ref):
    """One batch tile: 4 MXU matmuls + a handful of full-width VPU ops.

    Matmuls: block-diag layer-1, block-diag layer-2, and two block-diagonal
    averaging matmuls that implement the 7 segmented LayerNorm statistics.
    """
    x = x_ref[...]                          # (TB, 44)
    w1 = w1_ref[...]                        # (44, 128)  block-diag, zero pad
    w2 = w2_ref[...]                        # (128, 128) block-diag, zero pad
    avg = a_ref[...]                        # (128, 128) block-diag 1/dh
    b1 = c_ref[_B1:_B1 + 1, :]              # (1, 128)
    b2 = c_ref[_B2:_B2 + 1, :]
    gamma = c_ref[_GAMMA:_GAMMA + 1, :]
    beta = c_ref[_BETA:_BETA + 1, :]

    h = jnp.dot(x, w1, preferred_element_type=jnp.float32) + b1
    h = jnp.maximum(h, 0.0)
    y = jnp.dot(h, w2, preferred_element_type=jnp.float32) + b2   # (TB, 128)

    # Segmented (per-branch) LayerNorm statistics on the MXU:
    #   mu[:, k]  = mean of y over branch(k)'s lanes (0 on padded lanes)
    #   var[:, k] = biased variance over branch(k)'s lanes
    mu = jnp.dot(y, avg, preferred_element_type=jnp.float32)
    d = y - mu
    var = jnp.dot(d * d, avg, preferred_element_type=jnp.float32)

    inv = jax.lax.rsqrt(var + LN_EPS) * gamma
    # Single lane-dense full-width store.
    o_ref[...] = d * inv + beta


def pack_params(params):
    """Host-side, one-time packing into block-diagonal lane-padded arrays."""
    w1p = jnp.zeros((IN_DIM, P), jnp.float32)
    w2p = jnp.zeros((P, P), jnp.float32)
    avg = jnp.zeros((P, P), jnp.float32)      # block-diag averaging matrix
    consts = jnp.zeros((N_CONST_ROWS, P), jnp.float32)
    in_off = 0
    out_off = 0
    for name, din, dh in BRANCHES:
        w1, b1, w2, b2, gamma, beta = params[name]
        w1p = w1p.at[in_off:in_off + din, out_off:out_off + dh].set(w1)
        w2p = w2p.at[out_off:out_off + dh, out_off:out_off + dh].set(w2)
        avg = avg.at[out_off:out_off + dh, out_off:out_off + dh].set(1.0 / dh)
        consts = consts.at[_B1, out_off:out_off + dh].set(b1[0])
        consts = consts.at[_B2, out_off:out_off + dh].set(b2[0])
        consts = consts.at[_GAMMA, out_off:out_off + dh].set(gamma[0])
        consts = consts.at[_BETA, out_off:out_off + dh].set(beta[0])
        in_off += din
        out_off += dh
    return w1p, w2p, avg, consts


def manipulator_insert_forward(x_dict, packed_params):
    w1p, w2p, avg, consts = packed_params
    batch = x_dict["arm_pos"].shape[0]

    # glue: flatten arm_pos (.view(shape[0], -1)) and concat branch inputs.
    xs = []
    for name, din, _ in BRANCHES:
        xi = jnp.asarray(x_dict[name], jnp.float32).reshape(batch, -1)
        assert xi.shape[1] == din, (name, xi.shape)
        xs.append(xi)
    x_packed = jnp.concatenate(xs, axis=-1)              # (batch, 44)

    # Batch tiling: pick the number of grid steps first so tail padding is
    # bounded (< TB rows, never ~TB) and v7x's two TensorCores both get work
    # ("parallel" axis) once the batch is big enough to split.
    n_steps = _cdiv(batch, MAX_TILE_ROWS)
    if batch >= 16:
        n_steps = max(n_steps, 2)
    n_steps = max(n_steps, 1)
    TB = _round_up(_cdiv(batch, n_steps), 8)
    b_pad = _round_up(batch, TB)
    if b_pad != batch:
        x_packed = jnp.pad(x_packed, ((0, b_pad - batch), (0, 0)))
    grid = (b_pad // TB,)

    cost = pl.CostEstimate(
        flops=2 * b_pad * (IN_DIM * P + 3 * P * P) + 8 * b_pad * P,
        transcendentals=b_pad * P,
        bytes_accessed=4 * (b_pad * (IN_DIM + P)
                            + IN_DIM * P + 2 * P * P + N_CONST_ROWS * P),
    )

    out = pl.pallas_call(
        fused_kernel,
        out_shape=jax.ShapeDtypeStruct((b_pad, P), jnp.float32),
        grid=grid,
        in_specs=[
            pl.BlockSpec((TB, IN_DIM), lambda i: (i, 0)),        # activations
            pl.BlockSpec((IN_DIM, P), lambda i: (0, 0)),         # W1 (resident)
            pl.BlockSpec((P, P), lambda i: (0, 0)),              # W2 (resident)
            pl.BlockSpec((P, P), lambda i: (0, 0)),              # avg (resident)
            pl.BlockSpec((N_CONST_ROWS, P), lambda i: (0, 0)),   # consts
        ],
        out_specs=pl.BlockSpec((TB, P), lambda i: (i, 0)),
        compiler_params=pltpu.CompilerParams(
            dimension_semantics=("parallel",)),
        cost_estimate=cost,
    )(x_packed, w1p, w2p, avg, consts)

    # torch.cat result = first 88 (real) columns of the lane-padded output.
    return out[:batch, :OUT_DIM]


def init_params(key):
    """Deterministic parameter init (PyTorch-Linear-like uniform ranges)."""
    params = {}
    for name, din, dh in BRANCHES:
        key, k0, k1, k2, k3 = jax.random.split(key, 5)
        s1 = 1.0 / (din ** 0.5)
        s2 = 1.0 / (dh ** 0.5)
        w1 = jax.random.uniform(k0, (din, dh), jnp.float32, -s1, s1)
        b1 = jax.random.uniform(k1, (1, dh), jnp.float32, -s1, s1)
        w2 = jax.random.uniform(k2, (dh, dh), jnp.float32, -s2, s2)
        b2 = jax.random.uniform(k3, (1, dh), jnp.float32, -s2, s2)
        gamma = jnp.ones((1, dh), jnp.float32)   # LayerNorm weight
        beta = jnp.zeros((1, dh), jnp.float32)   # LayerNorm bias
        params[name] = (w1, b1, w2, b2, gamma, beta)
    return params


def reference_forward(x_dict, params):
    """Pure-JAX reference mirroring the PyTorch forward."""
    batch = x_dict["arm_pos"].shape[0]
    outs = []
    for name, din, _ in BRANCHES:
        xi = jnp.asarray(x_dict[name], jnp.float32).reshape(batch, -1)
        w1, b1, w2, b2, g, be = params[name]
        h = jnp.maximum(jnp.dot(xi, w1) + b1, 0.0)
        y = jnp.dot(h, w2) + b2
        mu = jnp.mean(y, axis=-1, keepdims=True)
        var = jnp.mean(jnp.square(y - mu), axis=-1, keepdims=True)
        outs.append((y - mu) * jax.lax.rsqrt(var + LN_EPS) * g + be)
    return jnp.concatenate(outs, axis=-1)


if __name__ == "__main__":
    key = jax.random.PRNGKey(0)
    key, pkey = jax.random.split(key)
    params = init_params(pkey)
    packed = pack_params(params)   # one-time, static per model

    batch = 2
    # arm_pos arrives as (batch, 8, 2) and is flattened with .view(batch, -1)
    input_shapes = {
        "arm_pos":    (batch, 8, 2),
        "arm_vel":    (batch, 8),
        "touch":      (batch, 5),
        "hand_pos":   (batch, 4),
        "object_pos": (batch, 4),
        "object_vel": (batch, 3),
        "target_pos": (batch, 4),
    }
    x = {}
    for name, shape in input_shapes.items():
        key, sub = jax.random.split(key)
        x[name] = jax.random.normal(sub, shape, jnp.float32)

    out = manipulator_insert_forward(x, packed)
    out = jax.block_until_ready(out)

    ref = reference_forward(x, params)
    assert out.shape == (batch, OUT_DIM), out.shape
    assert jnp.allclose(out, ref, atol=1e-4, rtol=1e-4), "mismatch vs reference"

    print("KERNEL_OK")
</pallas_src>

<mosaic_0001>
module attributes {stable_mosaic.version = 11 : i64} {
  func.func @fused_kernel(%arg0: i32, %arg1: memref<8x44xf32, #tpu.memory_space<vmem>>, %arg2: memref<44x128xf32, #tpu.memory_space<vmem>>, %arg3: memref<128x128xf32, #tpu.memory_space<vmem>>, %arg4: memref<128x128xf32, #tpu.memory_space<vmem>>, %arg5: memref<4x128xf32, #tpu.memory_space<vmem>>, %arg6: memref<8x128xf32, #tpu.memory_space<vmem>>) attributes {dimension_semantics = [#tpu.dimension_semantics<parallel>], iteration_bounds = array<i64: 1>, scalar_prefetch = 0 : i64, scratch_operands = 0 : i64, tpu.core_type = #tpu.core_type<tc>, window_params = [{transform_indices = @transform_0, window_bounds = array<i64: 8, 44>}, {pipeline_mode = #tpu.pipeline_mode<synchronous>, transform_indices = @transform_1, window_bounds = array<i64: 44, 128>}, {pipeline_mode = #tpu.pipeline_mode<synchronous>, transform_indices = @transform_2, window_bounds = array<i64: 128, 128>}, {pipeline_mode = #tpu.pipeline_mode<synchronous>, transform_indices = @transform_3, window_bounds = array<i64: 128, 128>}, {pipeline_mode = #tpu.pipeline_mode<synchronous>, transform_indices = @transform_4, window_bounds = array<i64: 4, 128>}, {transform_indices = @transform_5, window_bounds = array<i64: 8, 128>}]} {
    %c0 = arith.constant 0 : index
    %c0_0 = arith.constant 0 : index
    %0 = vector.load %arg1[%c0, %c0_0] : memref<8x44xf32, #tpu.memory_space<vmem>>, vector<8x44xf32>
    %c0_1 = arith.constant 0 : index
    %c0_2 = arith.constant 0 : index
    %1 = vector.load %arg2[%c0_1, %c0_2] : memref<44x128xf32, #tpu.memory_space<vmem>>, vector<44x128xf32>
    %c0_3 = arith.constant 0 : index
    %c0_4 = arith.constant 0 : index
    %2 = vector.load %arg3[%c0_3, %c0_4] : memref<128x128xf32, #tpu.memory_space<vmem>>, vector<128x128xf32>
    %c0_5 = arith.constant 0 : index
    %c0_6 = arith.constant 0 : index
    %3 = vector.load %arg4[%c0_5, %c0_6] : memref<128x128xf32, #tpu.memory_space<vmem>>, vector<128x128xf32>
    %c0_7 = arith.constant 0 : index
    %c0_8 = arith.constant 0 : index
    %4 = vector.load %arg5[%c0_7, %c0_8] : memref<4x128xf32, #tpu.memory_space<vmem>>, vector<1x128xf32>
    %c1 = arith.constant 1 : index
    %c0_9 = arith.constant 0 : index
    %5 = vector.load %arg5[%c1, %c0_9] : memref<4x128xf32, #tpu.memory_space<vmem>>, vector<1x128xf32>
    %c2 = arith.constant 2 : index
    %c0_10 = arith.constant 0 : index
    %6 = vector.load %arg5[%c2, %c0_10] : memref<4x128xf32, #tpu.memory_space<vmem>>, vector<1x128xf32>
    %c3 = arith.constant 3 : index
    %c0_11 = arith.constant 0 : index
    %7 = vector.load %arg5[%c3, %c0_11] : memref<4x128xf32, #tpu.memory_space<vmem>>, vector<1x128xf32>
    %cst = arith.constant dense<0.000000e+00> : vector<8x128xf32>
    %8 = tpu.matmul %0, %1, %cst {dimension_numbers = #tpu.dot_dimension_numbers<[1], [0], [0], [1], [0, 0, 1, 1], [], []>} : vector<8x44xf32>, vector<44x128xf32>, vector<8x128xf32> -> vector<8x128xf32>
    %9 = vector.broadcast %4 : vector<1x128xf32> to vector<8x128xf32>
    %10 = arith.addf %8, %9 : vector<8x128xf32>
    %cst_12 = arith.constant 0.000000e+00 : f32
    %11 = vector.broadcast %cst_12 : f32 to vector<8x128xf32>
    %12 = arith.maximumf %10, %11 : vector<8x128xf32>
    %cst_13 = arith.constant dense<0.000000e+00> : vector<8x128xf32>
    %13 = tpu.matmul %12, %2, %cst_13 {dimension_numbers = #tpu.dot_dimension_numbers<[1], [0], [0], [1], [0, 0, 1, 1], [], []>} : vector<8x128xf32>, vector<128x128xf32>, vector<8x128xf32> -> vector<8x128xf32>
    %14 = vector.broadcast %5 : vector<1x128xf32> to vector<8x128xf32>
    %15 = arith.addf %13, %14 : vector<8x128xf32>
    %cst_14 = arith.constant dense<0.000000e+00> : vector<8x128xf32>
    %16 = tpu.matmul %15, %3, %cst_14 {dimension_numbers = #tpu.dot_dimension_numbers<[1], [0], [0], [1], [0, 0, 1, 1], [], []>} : vector<8x128xf32>, vector<128x128xf32>, vector<8x128xf32> -> vector<8x128xf32>
    %17 = arith.subf %15, %16 : vector<8x128xf32>
    %18 = arith.mulf %17, %17 : vector<8x128xf32>
    %cst_15 = arith.constant dense<0.000000e+00> : vector<8x128xf32>
    %19 = tpu.matmul %18, %3, %cst_15 {dimension_numbers = #tpu.dot_dimension_numbers<[1], [0], [0], [1], [0, 0, 1, 1], [], []>} : vector<8x128xf32>, vector<128x128xf32>, vector<8x128xf32> -> vector<8x128xf32>
    %cst_16 = arith.constant 9.99999974E-6 : f32
    %20 = vector.broadcast %cst_16 : f32 to vector<8x128xf32>
    %21 = arith.addf %19, %20 : vector<8x128xf32>
    %22 = math.rsqrt %21 : vector<8x128xf32>
    %23 = vector.broadcast %6 : vector<1x128xf32> to vector<8x128xf32>
    %24 = arith.mulf %22, %23 : vector<8x128xf32>
    %25 = arith.mulf %17, %24 : vector<8x128xf32>
    %26 = vector.broadcast %7 : vector<1x128xf32> to vector<8x128xf32>
    %27 = arith.addf %25, %26 : vector<8x128xf32>
    %c0_17 = arith.constant 0 : index
    %c0_18 = arith.constant 0 : index
    %28 = vector.load %arg6[%c0_17, %c0_18] : memref<8x128xf32, #tpu.memory_space<vmem>>, vector<8x128xf32>
    tpu.vector_store %arg6[%c0_17, %c0_18], %27 {strides = array<i32>} : memref<8x128xf32, #tpu.memory_space<vmem>>, vector<8x128xf32>,
    return
  }
  func.func @transform_0(%arg0: i32) -> (i32, i32) {
    %c0_i32 = arith.constant 0 : i32
    %c0_i32_0 = arith.constant 0 : i32
    return %arg0, %c0_i32 : i32, i32
  }
  func.func @transform_1(%arg0: i32) -> (i32, i32) {
    %c0_i32 = arith.constant 0 : i32
    %c0_i32_0 = arith.constant 0 : i32
    %c0_i32_1 = arith.constant 0 : i32
    return %c0_i32, %c0_i32_0 : i32, i32
  }
  func.func @transform_2(%arg0: i32) -> (i32, i32) {
    %c0_i32 = arith.constant 0 : i32
    %c0_i32_0 = arith.constant 0 : i32
    %c0_i32_1 = arith.constant 0 : i32
    return %c0_i32, %c0_i32_0 : i32, i32
  }
  func.func @transform_3(%arg0: i32) -> (i32, i32) {
    %c0_i32 = arith.constant 0 : i32
    %c0_i32_0 = arith.constant 0 : i32
    %c0_i32_1 = arith.constant 0 : i32
    return %c0_i32, %c0_i32_0 : i32, i32
  }
  func.func @transform_4(%arg0: i32) -> (i32, i32) {
    %c0_i32 = arith.constant 0 : i32
    %c0_i32_0 = arith.constant 0 : i32
    %c0_i32_1 = arith.constant 0 : i32
    return %c0_i32, %c0_i32_0 : i32, i32
  }
  func.func @transform_5(%arg0: i32) -> (i32, i32) {
    %c0_i32 = arith.constant 0 : i32
    %c0_i32_0 = arith.constant 0 : i32
    return %arg0, %c0_i32 : i32, i32
  }
}

</mosaic_0001>

<llo_original>
// kernel: tpu_custom_call.1
$region0: #{tpu_custom_call.1}
  #allocation0 [shape = 'u32[]', space=smem, size = 0x4, offset = 0x4, fixed_abs, tag = 'smem constant byte address 0x4 - core index']
  #allocation1 [shape = 'u32[144,128]{1,0:T(1,128)}', space=vmem, size = 0x12000, scoped, tag = 'internal scratch']
  %s0 = inlined_call_operand.hbm [shape: f32[8,44], index: 0, kind: input, shape index: {}]
  %s1 = inlined_call_operand.hbm [shape: f32[44,128], index: 1, kind: input, shape index: {}]
  %s2 = inlined_call_operand.hbm [shape: f32[128,128], index: 2, kind: input, shape index: {}]
  %s3 = inlined_call_operand.hbm [shape: f32[128,128], index: 3, kind: input, shape index: {}]
  %s4 = inlined_call_operand.vmem [shape: f32[4,128], index: 4, kind: input, shape index: {}]
  %s5 = inlined_call_operand.hbm [shape: f32[8,128], index: 5, kind: output, shape index: {}]
  %s6 = sld [smem:[#allocation0]]
  $region46: #{tpu_custom_call.1} parent=0
    _
  %s8 = ssub.s32 1, %s6
  %s9 = scalar_select 0, %s8, %s6
  $region1: #{tpu_custom_call.1} parent=0
    #allocation2 [shape = 'u8[4096]{0}', space=vmem, size = 0x1000, scoped, tag = 'input window, operand 0, single buffered']
    #allocation3 [shape = 's32[1]{0}', space=sflag, size = 0x4, scoped, tag = 'scoped memory for tpu_custom_call.1']
    #allocation4 [shape = 's32[1]{0}', space=sflag, size = 0x4, scoped, tag = 'scoped memory for tpu_custom_call.1']
    #allocation5 [shape = 'u8[24576]{0}', space=vmem, size = 0x6000, scoped, tag = 'input window, operand 1, single buffered']
    #allocation6 [shape = 's32[1]{0}', space=sflag, size = 0x4, scoped, tag = 'scoped memory for tpu_custom_call.1']
    #allocation7 [shape = 'u8[65536]{0}', space=vmem, size = 0x10000, scoped, tag = 'input window, operand 2, single buffered']
    #allocation8 [shape = 'u8[65536]{0}', space=vmem, size = 0x10000, scoped, tag = 'input window, operand 3, single buffered']
    #allocation9 [shape = 's32[1]{0}', space=sflag, size = 0x4, scoped, tag = 'scoped memory for tpu_custom_call.1']
    #allocation10 [shape = 'u8[4096]{0}', space=vmem, size = 0x1000, scoped, tag = 'output window, operand 0, single buffered']
    %10 = vsyncpa [#allocation3], 0
    %11 = vsyncpa [#allocation6], 0
    %12 = vsyncpa [#allocation9], 0
    %13 = vsyncpa [#allocation4], 0
    // Predicated region
    $region2: #{tpu_custom_call.1} parent=1 // pred_check
      _
    $region3: #{tpu_custom_call.1} parent=1 // pred_check_branch
      %15 = sbr.rel (0) target = $region5
    $region4: #{tpu_custom_call.1} parent=1 // pred_region
      %s17 = ssub.s32 128, 128
      %18 = vsyncadd [#allocation3], %s17
      %s20 = sshll.u32 [#allocation2], 4
      %s21 = int_to_ptr.vmem [resolvable:$true] %s20
      %23 = dma.hbm_to_vmem [thread:$0]  %s0, 128, %s21, [#allocation3]
    $region5: #{tpu_custom_call.1} parent=1 // pred_fallthru
      _
    // Predicated region
    $region6: #{tpu_custom_call.1} parent=1 // pred_check
      _
    $region7: #{tpu_custom_call.1} parent=1 // pred_check_branch
      %25 = sbr.rel (0) target = $region9
    $region8: #{tpu_custom_call.1} parent=1 // pred_region
      %s27 = ssub.s32 768, 768
      %28 = vsyncadd [#allocation6], %s27
      %s29 = sshll.u32 [#allocation5], 4
      %s30 = int_to_ptr.vmem [resolvable:$true] %s29
      %35 = dma.hbm_to_vmem [thread:$0]  %s1, 768, %s30, [#allocation6], 128, 128, 8
    $region9: #{tpu_custom_call.1} parent=1 // pred_fallthru
      _
    // Predicated region
    $region10: #{tpu_custom_call.1} parent=1 // pred_check
      _
    $region11: #{tpu_custom_call.1} parent=1 // pred_check_branch
      %37 = sbr.rel (0) target = $region13
    $region12: #{tpu_custom_call.1} parent=1 // pred_region
      %s39 = ssub.s32 2048, 2048
      %40 = vsyncadd [#allocation6], %s39
      %s41 = sshll.u32 [#allocation7], 4
      %s42 = int_to_ptr.vmem [resolvable:$true] %s41
      %47 = dma.hbm_to_vmem [thread:$0]  %s2, 2048, %s42, [#allocation6], 128, 128, 8
    $region13: #{tpu_custom_call.1} parent=1 // pred_fallthru
      _
    // Predicated region
    $region14: #{tpu_custom_call.1} parent=1 // pred_check
      _
    $region15: #{tpu_custom_call.1} parent=1 // pred_check_branch
      %49 = sbr.rel (0) target = $region17
    $region16: #{tpu_custom_call.1} parent=1 // pred_region
      %s51 = ssub.s32 2048, 2048
      %52 = vsyncadd [#allocation9], %s51
      %s53 = sshll.u32 [#allocation8], 4
      %s54 = int_to_ptr.vmem [resolvable:$true] %s53
      %59 = dma.hbm_to_vmem [thread:$0]  %s3, 2048, %s54, [#allocation9], 128, 128, 8
    $region17: #{tpu_custom_call.1} parent=1 // pred_fallthru
      _
    // Predicated region
    $region18: #{tpu_custom_call.1} parent=1 // pred_check
      _
    $region19: #{tpu_custom_call.1} parent=1 // pred_check_branch
      %61 = sbr.rel (0) target = $region21
    $region20: #{tpu_custom_call.1} parent=1 // pred_region
      _
    $region21: #{tpu_custom_call.1} parent=1 // pred_fallthru
      _
    // Predicated region
    $region22: #{tpu_custom_call.1} parent=1 // pred_check
      _
    $region23: #{tpu_custom_call.1} parent=1 // pred_check_branch
      %63 = sbr.rel (0) target = $region25
    $region24: #{tpu_custom_call.1} parent=1 // pred_region
      %64 = dma.done [#allocation3], 128
    $region25: #{tpu_custom_call.1} parent=1 // pred_fallthru
      _
    // Predicated region
    $region26: #{tpu_custom_call.1} parent=1 // pred_check
      _
    $region27: #{tpu_custom_call.1} parent=1 // pred_check_branch
      %66 = sbr.rel (0) target = $region29
    $region28: #{tpu_custom_call.1} parent=1 // pred_region
      %67 = dma.done [#allocation6], 768
    $region29: #{tpu_custom_call.1} parent=1 // pred_fallthru
      _
    // Predicated region
    $region30: #{tpu_custom_call.1} parent=1 // pred_check
      _
    $region31: #{tpu_custom_call.1} parent=1 // pred_check_branch
      %69 = sbr.rel (0) target = $region33
    $region32: #{tpu_custom_call.1} parent=1 // pred_region
      %70 = dma.done [#allocation6], 2048
    $region33: #{tpu_custom_call.1} parent=1 // pred_fallthru
      _
    // Predicated region
    $region34: #{tpu_custom_call.1} parent=1 // pred_check
      _
    $region35: #{tpu_custom_call.1} parent=1 // pred_check_branch
      %72 = sbr.rel (0) target = $region37
    $region36: #{tpu_custom_call.1} parent=1 // pred_region
      %73 = dma.done [#allocation9], 2048
    $region37: #{tpu_custom_call.1} parent=1 // pred_fallthru
      _
    %v74 = vld [vmem:[#allocation2] sm:$0xff]
    %v75 = vld [vmem:[#allocation5] sm:$0xff]
    %v76 = vld [vmem:[#allocation5 + $0x8] sm:$0xff]
    %v77 = vld [vmem:[#allocation5 + $0x10] sm:$0xff]
    %v78 = vld [vmem:[#allocation5 + $0x18] sm:$0xff]
    %v79 = vld [vmem:[#allocation5 + $0x20] sm:$0xff]
    %v80 = vld [vmem:[#allocation5 + $0x28] sm:$0xf]
    %v81 = vld [vmem:[#allocation7] sm:$0xff]
    %v82 = vld [vmem:[#allocation7 + $0x8] sm:$0xff]
    %v83 = vld [vmem:[#allocation7 + $0x10] sm:$0xff]
    %v84 = vld [vmem:[#allocation7 + $0x18] sm:$0xff]
    %v85 = vld [vmem:[#allocation7 + $0x20] sm:$0xff]
    %v86 = vld [vmem:[#allocation7 + $0x28] sm:$0xff]
    %v87 = vld [vmem:[#allocation7 + $0x30] sm:$0xff]
    %v88 = vld [vmem:[#allocation7 + $0x38] sm:$0xff]
    %v89 = vld [vmem:[#allocation7 + $0x40] sm:$0xff]
    %v90 = vld [vmem:[#allocation7 + $0x48] sm:$0xff]
    %v91 = vld [vmem:[#allocation7 + $0x50] sm:$0xff]
    %v92 = vld [vmem:[#allocation7 + $0x58] sm:$0xff]
    %v93 = vld [vmem:[#allocation7 + $0x60] sm:$0xff]
    %v94 = vld [vmem:[#allocation7 + $0x68] sm:$0xff]
    %v95 = vld [vmem:[#allocation7 + $0x70] sm:$0xff]
    %v96 = vld [vmem:[#allocation7 + $0x78] sm:$0xff]
    %v97 = vld [vmem:[#allocation8] sm:$0xff]
    %v98 = vld [vmem:[#allocation8 + $0x8] sm:$0xff]
    %v99 = vld [vmem:[#allocation8 + $0x10] sm:$0xff]
    %v100 = vld [vmem:[#allocation8 + $0x18] sm:$0xff]
    %v101 = vld [vmem:[#allocation8 + $0x20] sm:$0xff]
    %v102 = vld [vmem:[#allocation8 + $0x28] sm:$0xff]
    %v103 = vld [vmem:[#allocation8 + $0x30] sm:$0xff]
    %v104 = vld [vmem:[#allocation8 + $0x38] sm:$0xff]
    %v105 = vld [vmem:[#allocation8 + $0x40] sm:$0xff]
    %v106 = vld [vmem:[#allocation8 + $0x48] sm:$0xff]
    %v107 = vld [vmem:[#allocation8 + $0x50] sm:$0xff]
    %v108 = vld [vmem:[#allocation8 + $0x58] sm:$0xff]
    %v109 = vld [vmem:[#allocation8 + $0x60] sm:$0xff]
    %v110 = vld [vmem:[#allocation8 + $0x68] sm:$0xff]
    %v111 = vld [vmem:[#allocation8 + $0x70] sm:$0xff]
    %v112 = vld [vmem:[#allocation8 + $0x78] sm:$0xff]
    %v113 = vld [vmem:[%s4] sm:$0x1]
    %v114 = vld [vmem:[%s4 + $0x1] sm:$0x1]
    %v115 = vld [vmem:[%s4 + $0x2] sm:$0x1]
    %v116 = vld [vmem:[%s4 + $0x3] sm:$0x1]
    %v117 = vlaneseq
    %v118 = vshrl.u32 %v117, 7
    %v119 = vsub.s32 0, %v118
    %v120 = vrot.slane %v113, %v119
    %vm121 = vcmask 359424
    %v123 = vsel %vm121, %v74, 0
    %vm125 = vcmask 1043456
    %v127 = vsel %vm125, %v80, 0
    %129 = vmatprep.subr.mxu0 0.0
    %130 = vmatpush1.msra.mxu0 %v75
    %131 = vmatprep.subr.mxu0 0.0
    %132 = vmatpush1.msra.mxu0 %v76
    %133 = vmatprep.subr.mxu0 0.0
    %134 = vmatpush1.msra.mxu0 %v77
    %135 = vmatprep.subr.mxu0 0.0
    %136 = vmatpush1.msra.mxu0 %v78
    %137 = vmatprep.subr.mxu0 0.0
    %138 = vmatpush1.msra.mxu0 %v79
    %139 = vmatprep.subr.mxu0 0.0
    %140 = vmatpush1.msra.mxu0 %v127
    %141 = vmatprep.subr.mxu0 0.0
    %142 = vmatpush1.msra.mxu0 0.0
    %143 = vmatprep.subr.mxu0 0.0
    %144 = vmatpush1.msra.mxu0 0.0
    %145 = vmatprep.subr.mxu0 0.0
    %146 = vmatpush1.msra.mxu0 0.0
    %147 = vmatprep.subr.mxu0 0.0
    %148 = vmatpush1.msra.mxu0 0.0
    %149 = vmatprep.subr.mxu0 0.0
    %150 = vmatpush1.msra.mxu0 0.0
    %151 = vmatprep.subr.mxu0 0.0
    %152 = vmatpush1.msra.mxu0 0.0
    %153 = vmatprep.subr.mxu0 0.0
    %154 = vmatpush1.msra.mxu0 0.0
    %155 = vmatprep.subr.mxu0 0.0
    %156 = vmatpush1.msra.mxu0 0.0
    %157 = vmatprep.subr.mxu0 0.0
    %158 = vmatpush1.msra.mxu0 0.0
    %159 = vmatprep.subr.mxu0 0.0
    %160 = vmatpush1.msra.mxu0 0.0
    %161 = vmatprep.subr.mxu0 0.0
    %162 = vmatpush1.msra.mxu0 0.0
    %163 = vmatprep.subr.mxu0 0.0
    %164 = vmatpush1.msra.mxu0 0.0
    %165 = vmatprep.subr.mxu0 0.0
    %166 = vmatpush1.msra.mxu0 0.0
    %167 = vmatprep.subr.mxu0 0.0
    %168 = vmatpush1.msra.mxu0 0.0
    %169 = vmatprep.subr.mxu0 0.0
    %170 = vmatpush1.msra.mxu0 0.0
    %171 = vmatprep.subr.mxu0 0.0
    %172 = vmatpush1.msra.mxu0 0.0
    %173 = vmatprep.subr.mxu0 0.0
    %174 = vmatpush1.msra.mxu0 0.0
    %175 = vmatprep.subr.mxu0 0.0
    %176 = vmatpush1.msra.mxu0 0.0
    %177 = vmatprep.subr.mxu0 0.0
    %178 = vmatpush1.msra.mxu0 0.0
    %179 = vmatprep.subr.mxu0 0.0
    %180 = vmatpush1.msra.mxu0 0.0
    %181 = vmatprep.subr.mxu0 0.0
    %182 = vmatpush1.msra.mxu0 0.0
    %183 = vmatprep.subr.mxu0 0.0
    %184 = vmatpush1.msra.mxu0 0.0
    %185 = vmatprep.subr.mxu0 0.0
    %186 = vmatpush1.msra.mxu0 0.0
    %187 = vmatprep.subr.mxu0 0.0
    %188 = vmatpush1.msra.mxu0 0.0
    %189 = vmatprep.subr.mxu0 0.0
    %190 = vmatpush1.msra.mxu0 0.0
    %191 = vmatprep.subr.mxu0 0.0
    %192 = vmatpush1.msra.mxu0 0.0
    %193 = vmatprep.mubr.f32.mxu0 0.0
    %194 = vmatmul.mubr.f32.gmra.mrb[0].mxu0 %v123
    %v195 = vpop.f32.mrb[0].mxu0
    %v196 = vadd.f32 %v120, %v195
    %v197 = vpop.f32.mrb[0].mxu0
    %198 = vdwg.mxu0
    %v199 = vmax.f32 %v196, 0.0
    %v200 = vlaneseq
    %v201 = vshrl.u32 %v200, 7
    %v202 = vsub.s32 0, %v201
    %v203 = vrot.slane %v114, %v202
    %204 = vmatprep.subr.mxu0 0.0
    %205 = vmatpush1.msra.mxu0 %v81
    %206 = vmatprep.subr.mxu0 0.0
    %207 = vmatpush1.msra.mxu0 %v82
    %208 = vmatprep.subr.mxu0 0.0
    %209 = vmatpush1.msra.mxu0 %v83
    %210 = vmatprep.subr.mxu0 0.0
    %211 = vmatpush1.msra.mxu0 %v84
    %212 = vmatprep.subr.mxu0 0.0
    %213 = vmatpush1.msra.mxu0 %v85
    %214 = vmatprep.subr.mxu0 0.0
    %215 = vmatpush1.msra.mxu0 %v86
    %216 = vmatprep.subr.mxu0 0.0
    %217 = vmatpush1.msra.mxu0 %v87
    %218 = vmatprep.subr.mxu0 0.0
    %219 = vmatpush1.msra.mxu0 %v88
    %220 = vmatprep.subr.mxu0 0.0
    %221 = vmatpush1.msra.mxu0 %v89
    %222 = vmatprep.subr.mxu0 0.0
    %223 = vmatpush1.msra.mxu0 %v90
    %224 = vmatprep.subr.mxu0 0.0
    %225 = vmatpush1.msra.mxu0 %v91
    %226 = vmatprep.subr.mxu0 0.0
    %227 = vmatpush1.msra.mxu0 %v92
    %228 = vmatprep.subr.mxu0 0.0
    %229 = vmatpush1.msra.mxu0 %v93
    %230 = vmatprep.subr.mxu0 0.0
    %231 = vmatpush1.msra.mxu0 %v94
    %232 = vmatprep.subr.mxu0 0.0
    %233 = vmatpush1.msra.mxu0 %v95
    %234 = vmatprep.subr.mxu0 0.0
    %235 = vmatpush1.msra.mxu0 %v96
    %236 = vmatprep.subr.mxu0 0.0
    %237 = vmatpush1.msra.mxu0 0.0
    %238 = vmatprep.subr.mxu0 0.0
    %239 = vmatpush1.msra.mxu0 0.0
    %240 = vmatprep.subr.mxu0 0.0
    %241 = vmatpush1.msra.mxu0 0.0
    %242 = vmatprep.subr.mxu0 0.0
    %243 = vmatpush1.msra.mxu0 0.0
    %244 = vmatprep.subr.mxu0 0.0
    %245 = vmatpush1.msra.mxu0 0.0
    %246 = vmatprep.subr.mxu0 0.0
    %247 = vmatpush1.msra.mxu0 0.0
    %248 = vmatprep.subr.mxu0 0.0
    %249 = vmatpush1.msra.mxu0 0.0
    %250 = vmatprep.subr.mxu0 0.0
    %251 = vmatpush1.msra.mxu0 0.0
    %252 = vmatprep.subr.mxu0 0.0
    %253 = vmatpush1.msra.mxu0 0.0
    %254 = vmatprep.subr.mxu0 0.0
    %255 = vmatpush1.msra.mxu0 0.0
    %256 = vmatprep.subr.mxu0 0.0
    %257 = vmatpush1.msra.mxu0 0.0
    %258 = vmatprep.subr.mxu0 0.0
    %259 = vmatpush1.msra.mxu0 0.0
    %260 = vmatprep.subr.mxu0 0.0
    %261 = vmatpush1.msra.mxu0 0.0
    %262 = vmatprep.subr.mxu0 0.0
    %263 = vmatpush1.msra.mxu0 0.0
    %264 = vmatprep.subr.mxu0 0.0
    %265 = vmatpush1.msra.mxu0 0.0
    %266 = vmatprep.subr.mxu0 0.0
    %267 = vmatpush1.msra.mxu0 0.0
    %268 = vmatprep.mubr.f32.mxu0 0.0
    %269 = vmatmul.mubr.f32.gmra.mrb[0].mxu0 %v199
    %v270 = vpop.f32.mrb[0].mxu0
    %v271 = vadd.f32 %v203, %v270
    %v272 = vpop.f32.mrb[0].mxu0
    %273 = vdwg.mxu0
    %274 = vmatprep.subr.mxu0 0.0
    %275 = vmatpush1.msra.mxu0 %v97
    %276 = vmatprep.subr.mxu0 0.0
    %277 = vmatpush1.msra.mxu0 %v98
    %278 = vmatprep.subr.mxu0 0.0
    %279 = vmatpush1.msra.mxu0 %v99
    %280 = vmatprep.subr.mxu0 0.0
    %281 = vmatpush1.msra.mxu0 %v100
    %282 = vmatprep.subr.mxu0 0.0
    %283 = vmatpush1.msra.mxu0 %v101
    %284 = vmatprep.subr.mxu0 0.0
    %285 = vmatpush1.msra.mxu0 %v102
    %286 = vmatprep.subr.mxu0 0.0
    %287 = vmatpush1.msra.mxu0 %v103
    %288 = vmatprep.subr.mxu0 0.0
    %289 = vmatpush1.msra.mxu0 %v104
    %290 = vmatprep.subr.mxu0 0.0
    %291 = vmatpush1.msra.mxu0 %v105
    %292 = vmatprep.subr.mxu0 0.0
    %293 = vmatpush1.msra.mxu0 %v106
    %294 = vmatprep.subr.mxu0 0.0
    %295 = vmatpush1.msra.mxu0 %v107
    %296 = vmatprep.subr.mxu0 0.0
    %297 = vmatpush1.msra.mxu0 %v108
    %298 = vmatprep.subr.mxu0 0.0
    %299 = vmatpush1.msra.mxu0 %v109
    %300 = vmatprep.subr.mxu0 0.0
    %301 = vmatpush1.msra.mxu0 %v110
    %302 = vmatprep.subr.mxu0 0.0
    %303 = vmatpush1.msra.mxu0 %v111
    %304 = vmatprep.subr.mxu0 0.0
    %305 = vmatpush1.msra.mxu0 %v112
    %306 = vmatprep.subr.mxu0 0.0
    %307 = vmatpush1.msra.mxu0 0.0
    %308 = vmatprep.subr.mxu0 0.0
    %309 = vmatpush1.msra.mxu0 0.0
    %310 = vmatprep.subr.mxu0 0.0
    %311 = vmatpush1.msra.mxu0 0.0
    %312 = vmatprep.subr.mxu0 0.0
    %313 = vmatpush1.msra.mxu0 0.0
    %314 = vmatprep.subr.mxu0 0.0
    %315 = vmatpush1.msra.mxu0 0.0
    %316 = vmatprep.subr.mxu0 0.0
    %317 = vmatpush1.msra.mxu0 0.0
    %318 = vmatprep.subr.mxu0 0.0
    %319 = vmatpush1.msra.mxu0 0.0
    %320 = vmatprep.subr.mxu0 0.0
    %321 = vmatpush1.msra.mxu0 0.0
    %322 = vmatprep.subr.mxu0 0.0
    %323 = vmatpush1.msra.mxu0 0.0
    %324 = vmatprep.subr.mxu0 0.0
    %325 = vmatpush1.msra.mxu0 0.0
    %326 = vmatprep.subr.mxu0 0.0
    %327 = vmatpush1.msra.mxu0 0.0
    %328 = vmatprep.subr.mxu0 0.0
    %329 = vmatpush1.msra.mxu0 0.0
    %330 = vmatprep.subr.mxu0 0.0
    %331 = vmatpush1.msra.mxu0 0.0
    %332 = vmatprep.subr.mxu0 0.0
    %333 = vmatpush1.msra.mxu0 0.0
    %334 = vmatprep.subr.mxu0 0.0
    %335 = vmatpush1.msra.mxu0 0.0
    %336 = vmatprep.subr.mxu0 0.0
    %337 = vmatpush1.msra.mxu0 0.0
    %338 = vmatprep.mubr.f32.mxu0 0.0
    %339 = vmatmul.mubr.f32.gmra.mrb[0].mxu0 %v271
    %v340 = vpop.f32.mrb[0].mxu0
    %v341 = vadd.f32 0.0, %v340
    %v342 = vpop.f32.mrb[0].mxu0
    %343 = vdwg.mxu0
    %v344 = vsub.f32 %v271, %v341
    %v345 = vmul.f32 %v344, %v344
    %346 = vmatprep.subr.mxu0 0.0
    %347 = vmatpush1.msra.mxu0 %v97
    %348 = vmatprep.subr.mxu0 0.0
    %349 = vmatpush1.msra.mxu0 %v98
    %350 = vmatprep.subr.mxu0 0.0
    %351 = vmatpush1.msra.mxu0 %v99
    %352 = vmatprep.subr.mxu0 0.0
    %353 = vmatpush1.msra.mxu0 %v100
    %354 = vmatprep.subr.mxu0 0.0
    %355 = vmatpush1.msra.mxu0 %v101
    %356 = vmatprep.subr.mxu0 0.0
    %357 = vmatpush1.msra.mxu0 %v102
    %358 = vmatprep.subr.mxu0 0.0
    %359 = vmatpush1.msra.mxu0 %v103
    %360 = vmatprep.subr.mxu0 0.0
    %361 = vmatpush1.msra.mxu0 %v104
    %362 = vmatprep.subr.mxu0 0.0
    %363 = vmatpush1.msra.mxu0 %v105
    %364 = vmatprep.subr.mxu0 0.0
    %365 = vmatpush1.msra.mxu0 %v106
    %366 = vmatprep.subr.mxu0 0.0
    %367 = vmatpush1.msra.mxu0 %v107
    %368 = vmatprep.subr.mxu0 0.0
    %369 = vmatpush1.msra.mxu0 %v108
    %370 = vmatprep.subr.mxu0 0.0
    %371 = vmatpush1.msra.mxu0 %v109
    %372 = vmatprep.subr.mxu0 0.0
    %373 = vmatpush1.msra.mxu0 %v110
    %374 = vmatprep.subr.mxu0 0.0
    %375 = vmatpush1.msra.mxu0 %v111
    %376 = vmatprep.subr.mxu0 0.0
    %377 = vmatpush1.msra.mxu0 %v112
    %378 = vmatprep.subr.mxu0 0.0
    %379 = vmatpush1.msra.mxu0 0.0
    %380 = vmatprep.subr.mxu0 0.0
    %381 = vmatpush1.msra.mxu0 0.0
    %382 = vmatprep.subr.mxu0 0.0
    %383 = vmatpush1.msra.mxu0 0.0
    %384 = vmatprep.subr.mxu0 0.0
    %385 = vmatpush1.msra.mxu0 0.0
    %386 = vmatprep.subr.mxu0 0.0
    %387 = vmatpush1.msra.mxu0 0.0
    %388 = vmatprep.subr.mxu0 0.0
    %389 = vmatpush1.msra.mxu0 0.0
    %390 = vmatprep.subr.mxu0 0.0
    %391 = vmatpush1.msra.mxu0 0.0
    %392 = vmatprep.subr.mxu0 0.0
    %393 = vmatpush1.msra.mxu0 0.0
    %394 = vmatprep.subr.mxu0 0.0
    %395 = vmatpush1.msra.mxu0 0.0
    %396 = vmatprep.subr.mxu0 0.0
    %397 = vmatpush1.msra.mxu0 0.0
    %398 = vmatprep.subr.mxu0 0.0
    %399 = vmatpush1.msra.mxu0 0.0
    %400 = vmatprep.subr.mxu0 0.0
    %401 = vmatpush1.msra.mxu0 0.0
    %402 = vmatprep.subr.mxu0 0.0
    %403 = vmatpush1.msra.mxu0 0.0
    %404 = vmatprep.subr.mxu0 0.0
    %405 = vmatpush1.msra.mxu0 0.0
    %406 = vmatprep.subr.mxu0 0.0
    %407 = vmatpush1.msra.mxu0 0.0
    %408 = vmatprep.subr.mxu0 0.0
    %409 = vmatpush1.msra.mxu0 0.0
    %410 = vmatprep.mubr.f32.mxu0 0.0
    %411 = vmatmul.mubr.f32.gmra.mrb[0].mxu0 %v345
    %v412 = vpop.f32.mrb[0].mxu0
    %v413 = vadd.f32 1e-05, %v412
    %v414 = vpop.f32.mrb[0].mxu0
    %415 = vdwg.mxu0
    %v416 = vrsqrt.pop %v413
    %v417 = vlaneseq
    %v418 = vshrl.u32 %v417, 7
    %v419 = vsub.s32 0, %v418
    %v420 = vrot.slane %v115, %v419
    %v421 = vmul.f32 %v416, %v420
    %v422 = vmul.f32 %v344, %v421
    %v423 = vlaneseq
    %v424 = vshrl.u32 %v423, 7
    %v425 = vsub.s32 0, %v424
    %v426 = vrot.slane %v116, %v425
    %v427 = vadd.f32 %v422, %v426
    %428 = vst [vmem:[#allocation10] sm:$0xff] %v427
    // Predicated region
    $region38: #{tpu_custom_call.1} parent=1 // pred_check
      _
    $region39: #{tpu_custom_call.1} parent=1 // pred_check_branch
      %430 = sbr.rel (0) target = $region41
    $region40: #{tpu_custom_call.1} parent=1 // pred_region
      %s432 = ssub.s32 128, 128
      %433 = vsyncadd [#allocation4], %s432
      %s435 = sshll.u32 [#allocation10], 4
      %s436 = int_to_ptr.vmem [resolvable:$true] %s435
      %438 = dma.vmem_to_hbm [thread:$0]  %s436, 128, %s5, [#allocation4]
    $region41: #{tpu_custom_call.1} parent=1 // pred_fallthru
      _
    // Predicated region
    $region42: #{tpu_custom_call.1} parent=1 // pred_check
      _
    $region43: #{tpu_custom_call.1} parent=1 // pred_check_branch
      %440 = sbr.rel (0) target = $region45
    $region44: #{tpu_custom_call.1} parent=1 // pred_region
      %441 = dma.done [#allocation4], 128
    $region45: #{tpu_custom_call.1} parent=1 // pred_fallthru
      _
    %442 = vsyncpa [#allocation3], 1
    %443 = vsyncpa [#allocation6], 1
    %444 = vsyncpa [#allocation9], 1
    %445 = vsyncpa [#allocation4], 1

</llo_original>
